<compile_context>
chip_gen: v7x
topology: tpu7x:2x2x1
jax: 0.10.0
libtpu: 0.0.40
codegen_flags: <defaults>
</compile_context>

<pallas_src>
import functools

import jax
import jax.numpy as jnp
from jax.experimental import pallas as pl
from jax.experimental.pallas import tpu as pltpu


def _round_up(x, m):
    return ((x + m - 1) // m) * m


# --------------------------------------------------------------------------
# Kernels
# --------------------------------------------------------------------------
def _coupling_kernel_fused(x_ref, mask_ref, inv_mask_ref,
                           w1_ref, b1_ref, w2_ref, b2_ref, w3_ref, b3_ref,
                           y_ref, logdet_ref):
    """Scale/translate nets fused end-to-end.

    w1: (D_pad, 2H_pad)              fused layer-1
    w2: (2H_pad, 2H_pad) block-diag  fused layer-2
    w3: (2H_pad, 2D_pad) block-diag  fused layer-3 -> [s_pre | t_pre]
    Fills the 256-wide MXU on v6e/v7x when D_pad == H_pad == 128.
    """
    x = x_ref[...]                        # (TILE_B, D_pad) f32
    mask = mask_ref[...]                  # (1, D_pad) f32, padded lanes = 1
    inv_mask = inv_mask_ref[...]          # (1, D_pad) f32, padded lanes = 0
    x_masked = x * mask
    d_pad = x_ref.shape[1]

    h1 = jnp.dot(x_masked.astype(jnp.bfloat16), w1_ref[...],
                 preferred_element_type=jnp.float32) + b1_ref[...]
    h1 = jnp.maximum(h1, 0.0)

    h2 = jnp.dot(h1.astype(jnp.bfloat16), w2_ref[...],
                 preferred_element_type=jnp.float32) + b2_ref[...]
    h2 = jnp.maximum(h2, 0.0)

    st = jnp.dot(h2.astype(jnp.bfloat16), w3_ref[...],
                 preferred_element_type=jnp.float32) + b3_ref[...]
    s = jnp.tanh(st[:, :d_pad]) * inv_mask     # padded lanes -> exactly 0
    t = st[:, d_pad:] * inv_mask

    y_ref[...] = x_masked + inv_mask * (x * jnp.exp(s) + t)
    logdet_ref[...] = jnp.sum(s, axis=1, keepdims=True)   # (TILE_B, 1)


def _coupling_kernel_split(x_ref, mask_ref, inv_mask_ref,
                           w1_ref, b1_ref,
                           w2s_ref, b2s_ref, w3s_ref, b3s_ref,
                           w2t_ref, b2t_ref, w3t_ref, b3t_ref,
                           y_ref, logdet_ref):
    """Layer-1 fused, layers 2/3 kept per-net (general D/H; v5e-friendly)."""
    x = x_ref[...]
    mask = mask_ref[...]
    inv_mask = inv_mask_ref[...]
    x_masked = x * mask
    h_pad = w2s_ref.shape[0]

    h1 = jnp.dot(x_masked.astype(jnp.bfloat16), w1_ref[...],
                 preferred_element_type=jnp.float32) + b1_ref[...]
    h1 = jnp.maximum(h1, 0.0)
    hs = h1[:, :h_pad]                    # scale-net hidden (128-aligned slice)
    ht = h1[:, h_pad:]                    # translate-net hidden

    hs2 = jnp.maximum(
        jnp.dot(hs.astype(jnp.bfloat16), w2s_ref[...],
                preferred_element_type=jnp.float32) + b2s_ref[...], 0.0)
    s = jnp.tanh(jnp.dot(hs2.astype(jnp.bfloat16), w3s_ref[...],
                         preferred_element_type=jnp.float32) + b3s_ref[...])
    s = s * inv_mask

    ht2 = jnp.maximum(
        jnp.dot(ht.astype(jnp.bfloat16), w2t_ref[...],
                preferred_element_type=jnp.float32) + b2t_ref[...], 0.0)
    t = (jnp.dot(ht2.astype(jnp.bfloat16), w3t_ref[...],
                 preferred_element_type=jnp.float32) + b3t_ref[...]) * inv_mask

    y_ref[...] = x_masked + inv_mask * (x * jnp.exp(s) + t)
    logdet_ref[...] = jnp.sum(s, axis=1, keepdims=True)   # (TILE_B, 1)


# --------------------------------------------------------------------------
# One-time parameter preparation (hoisted out of the per-call path)
# --------------------------------------------------------------------------
def prepare_coupling(mask, params, *, fuse_l23=None):
    """Pad / fuse / bf16-cast weights once.  Returns (cfg, operands).

    cfg      : plain-Python metadata (safe to close over under jit).
    operands : tuple of device arrays passed to every forward call.
    """
    D, H = params["w1s"].shape
    d_pad = _round_up(D, 128)
    h_pad = _round_up(H, 128)
    if fuse_l23 is None:
        # Block-diagonal L2/L3 fusion fills the 256-wide MXU on v6e/v7x; only
        # worth it when each per-net operand is a single 128 tile (otherwise it
        # just doubles real FLOPs/weight bytes, e.g. on v5e's 128x128 MXUs).
        fuse_l23 = (d_pad == 128 and h_pad == 128)

    def pad_w(w, rows, cols):
        out = jnp.zeros((rows, cols), jnp.float32)
        return out.at[: w.shape[0], : w.shape[1]].set(w.astype(jnp.float32))

    def pad_b(b, cols):
        out = jnp.zeros((1, cols), jnp.float32)
        return out.at[0, : b.shape[0]].set(b.astype(jnp.float32))

    def block_diag(a, b, rows, cols):
        out = jnp.zeros((2 * rows, 2 * cols), jnp.float32)
        out = out.at[: a.shape[0], : a.shape[1]].set(a.astype(jnp.float32))
        return out.at[rows: rows + b.shape[0],
                      cols: cols + b.shape[1]].set(b.astype(jnp.float32))

    # Padded mask lanes = 1  =>  (1 - mask) = 0 there, so s = t = 0 on padding
    # (exp(s) = 1, log_det exact, no junk leaks into y's padded lanes).
    maskp = jnp.ones((1, d_pad), jnp.float32).at[0, :D].set(
        mask.reshape(-1).astype(jnp.float32))
    inv_maskp = 1.0 - maskp

    # Fused layer-1 of both nets: one (D_pad, 2*H_pad) matmul.
    w1 = jnp.concatenate([pad_w(params["w1s"], d_pad, h_pad),
                          pad_w(params["w1t"], d_pad, h_pad)],
                         axis=1).astype(jnp.bfloat16)
    b1 = jnp.concatenate([pad_b(params["b1s"], h_pad),
                          pad_b(params["b1t"], h_pad)], axis=1)

    if fuse_l23:
        w2 = block_diag(params["w2s"], params["w2t"], h_pad, h_pad).astype(jnp.bfloat16)
        b2 = jnp.concatenate([pad_b(params["b2s"], h_pad),
                              pad_b(params["b2t"], h_pad)], axis=1)
        w3 = block_diag(params["w3s"], params["w3t"], h_pad, d_pad).astype(jnp.bfloat16)
        b3 = jnp.concatenate([pad_b(params["b3s"], d_pad),
                              pad_b(params["b3t"], d_pad)], axis=1)
        operands = (maskp, inv_maskp, w1, b1, w2, b2, w3, b3)
    else:
        operands = (
            maskp, inv_maskp, w1, b1,
            pad_w(params["w2s"], h_pad, h_pad).astype(jnp.bfloat16),
            pad_b(params["b2s"], h_pad),
            pad_w(params["w3s"], h_pad, d_pad).astype(jnp.bfloat16),
            pad_b(params["b3s"], d_pad),
            pad_w(params["w2t"], h_pad, h_pad).astype(jnp.bfloat16),
            pad_b(params["b2t"], h_pad),
            pad_w(params["w3t"], h_pad, d_pad).astype(jnp.bfloat16),
            pad_b(params["b3t"], d_pad),
        )

    cfg = dict(input_dim=D, hidden_dim=H, d_pad=d_pad, h_pad=h_pad,
               fuse_l23=bool(fuse_l23))
    return cfg, operands


# --------------------------------------------------------------------------
# Forward wrapper
# --------------------------------------------------------------------------
def coupling_layer_forward(x, operands, *, cfg, max_tile_b=512,
                           weight_buffer_count=None):
    """Forward (invert=False).  x: (B, D) f32.  Returns (y, log_det)."""
    B, D = x.shape
    assert D == cfg["input_dim"], "x feature dim does not match prepared params"
    d_pad, h_pad = cfg["d_pad"], cfg["h_pad"]
    fuse = cfg["fuse_l23"]

    if x.dtype != jnp.float32:
        x = x.astype(jnp.float32)

    # Batch tiling: multiples of 8, big tiles (mem-bound kernels need >=512-row
    # tiles to approach the HBM roofline), but keep >=2 grid steps when the
    # batch allows it so the "parallel" axis can shard across v7x's two TCs.
    b8 = _round_up(B, 8)
    tile_b = min(max_tile_b, b8)
    if b8 >= 16 and b8 // tile_b < 2:
        tile_b = _round_up(pl.cdiv(b8, 2), 8)
    b_pad = _round_up(b8, tile_b)

    # Only re-materialize x when padding is actually required (the pad is an
    # extra HBM read+write pass outside the kernel).
    aligned = (b_pad == B and d_pad == D)
    if aligned:
        xp = x
    else:
        xp = jnp.zeros((b_pad, d_pad), jnp.float32).at[:B, :D].set(x)

    grid = (b_pad // tile_b,)

    def batch_spec(shape):
        return pl.BlockSpec(shape, lambda i: (i, 0))

    def resident_spec(arr):
        # Constant index_map: operand stays resident in VMEM across the grid.
        if weight_buffer_count is None:
            return pl.BlockSpec(arr.shape, lambda i: (0, 0))
        # e.g. weight_buffer_count=1 on v7x (64 MiB VMEM) to drop the wasted
        # second buffer of never-changing weights.
        return pl.BlockSpec(arr.shape, lambda i: (0, 0),
                            pipeline_mode=pl.Buffered(weight_buffer_count))

    in_specs = [batch_spec((tile_b, d_pad))] + [resident_spec(a) for a in operands]
    kernel = _coupling_kernel_fused if fuse else _coupling_kernel_split

    # Advisory cost estimate for XLA scheduling around the custom call.
    if fuse:
        flops = 2 * b_pad * (d_pad * 2 * h_pad
                             + (2 * h_pad) * (2 * h_pad)
                             + (2 * h_pad) * (2 * d_pad))
    else:
        flops = 2 * b_pad * (d_pad * 2 * h_pad
                             + 2 * h_pad * h_pad
                             + 2 * h_pad * d_pad)
    resident_bytes = sum(int(a.size) * a.dtype.itemsize for a in operands)
    bytes_accessed = resident_bytes + 2 * b_pad * d_pad * 4 + b_pad * 4
    cost = pl.CostEstimate(flops=flops, transcendentals=2 * b_pad * d_pad,
                           bytes_accessed=bytes_accessed)

    # VMEM budget: resident weights (double-buffered unless Buffered(1)),
    # double-buffered x/y tiles, logdet tile, and the f32 h1/h2 intermediates.
    wbuf = 2 if weight_buffer_count is None else max(1, weight_buffer_count)
    tile_io = tile_b * d_pad * 4
    h1_bytes = tile_b * 2 * h_pad * 4
    vmem_needed = (wbuf * resident_bytes + 4 * tile_io + 2 * tile_b * 4
                   + 4 * h1_bytes)
    vmem_limit = int(min(64 * 2**20, max(32 * 2**20, 2 * vmem_needed)))

    y_p, ld_p = pl.pallas_call(
        kernel,
        out_shape=(
            jax.ShapeDtypeStruct((b_pad, d_pad), jnp.float32),
            jax.ShapeDtypeStruct((b_pad, 1), jnp.float32),   # tiny: 4 B/row
        ),
        grid=grid,
        in_specs=in_specs,
        out_specs=(batch_spec((tile_b, d_pad)), batch_spec((tile_b, 1))),
        compiler_params=pltpu.CompilerParams(
            dimension_semantics=("parallel",),
            vmem_limit_bytes=vmem_limit),
        cost_estimate=cost,
    )(xp, *operands)

    y = y_p if aligned else y_p[:B, :D]
    log_det = ld_p[:, 0] if b_pad == B else ld_p[:B, 0]
    return y, log_det


# --------------------------------------------------------------------------
# Reference + synthetic init (for the self-test)
# --------------------------------------------------------------------------
def init_params(key, input_dim, hidden_dim):
    """Deterministic synthetic init (Kaiming-ish uniform like nn.Linear).

    Weights are stored (fan_in, fan_out); a PyTorch nn.Linear weight would be
    transposed before being placed here.
    """
    keys = jax.random.split(key, 12)

    def linear(kw, kb, fan_in, fan_out):
        bound = 1.0 / jnp.sqrt(fan_in)
        w = jax.random.uniform(kw, (fan_in, fan_out), jnp.float32, -bound, bound)
        b = jax.random.uniform(kb, (fan_out,), jnp.float32, -bound, bound)
        return w, b

    w1s, b1s = linear(keys[0], keys[1], input_dim, hidden_dim)
    w2s, b2s = linear(keys[2], keys[3], hidden_dim, hidden_dim)
    w3s, b3s = linear(keys[4], keys[5], hidden_dim, input_dim)
    w1t, b1t = linear(keys[6], keys[7], input_dim, hidden_dim)
    w2t, b2t = linear(keys[8], keys[9], hidden_dim, hidden_dim)
    w3t, b3t = linear(keys[10], keys[11], hidden_dim, input_dim)
    return dict(w1s=w1s, b1s=b1s, w2s=w2s, b2s=b2s, w3s=w3s, b3s=b3s,
                w1t=w1t, b1t=b1t, w2t=w2t, b2t=b2t, w3t=w3t, b3t=b3t)


def reference_forward(x, mask, params, *, bf16_mxu=False):
    """Plain-JAX reference mirroring the PyTorch forward (invert=False)."""
    mask = mask.reshape(1, -1)
    xm = x * mask

    def dot(a, w):
        if bf16_mxu:
            return jnp.dot(a.astype(jnp.bfloat16), w.astype(jnp.bfloat16),
                           preferred_element_type=jnp.float32)
        return jnp.dot(a, w, preferred_element_type=jnp.float32)

    h = jnp.maximum(dot(xm, params["w1s"]) + params["b1s"], 0.0)
    h = jnp.maximum(dot(h, params["w2s"]) + params["b2s"], 0.0)
    s = jnp.tanh(dot(h, params["w3s"]) + params["b3s"]) * (1.0 - mask)
    g = jnp.maximum(dot(xm, params["w1t"]) + params["b1t"], 0.0)
    g = jnp.maximum(dot(g, params["w2t"]) + params["b2t"], 0.0)
    t = (dot(g, params["w3t"]) + params["b3t"]) * (1.0 - mask)
    y = xm + (1.0 - mask) * (x * jnp.exp(s) + t)
    return y, jnp.sum(s, axis=1)


# --------------------------------------------------------------------------
if __name__ == "__main__":
    key = jax.random.PRNGKey(0)
    kx, kp, kx2 = jax.random.split(key, 3)

    B, D, H = 8, 4, 32
    x = jax.random.normal(kx, (B, D), jnp.float32)
    mask = jnp.asarray([1.0, 0.0, 1.0, 0.0], jnp.float32)   # RealNVP checkerboard
    params = init_params(kp, D, H)

    # ---- default path: fused block-diagonal L2/L3 kernel --------------------
    cfg, operands = prepare_coupling(mask, params)
    fwd = jax.jit(functools.partial(coupling_layer_forward, cfg=cfg))
    y, log_det = fwd(x, operands)
    jax.block_until_ready((y, log_det))

    y_bf, ld_bf = reference_forward(x, mask, params, bf16_mxu=True)
    assert jnp.allclose(y, y_bf, atol=1e-3), "y mismatch vs bf16-matched ref"
    assert jnp.allclose(log_det, ld_bf, atol=1e-3), "log_det mismatch vs bf16 ref"

    y_ref, ld_ref = reference_forward(x, mask, params)
    assert jnp.allclose(y, y_ref, atol=5e-2), "y mismatch vs f32 reference"
    assert jnp.allclose(log_det, ld_ref, atol=5e-2), "log_det mismatch vs f32 ref"

    # ---- fallback path: split per-net kernel, multi-step grid (B=16 -> 2) ---
    B2 = 16
    x2 = jax.random.normal(kx2, (B2, D), jnp.float32)
    cfg2, operands2 = prepare_coupling(mask, params, fuse_l23=False)
    fwd2 = jax.jit(functools.partial(coupling_layer_forward, cfg=cfg2))
    y2, ld2 = fwd2(x2, operands2)
    jax.block_until_ready((y2, ld2))

    y2_bf, ld2_bf = reference_forward(x2, mask, params, bf16_mxu=True)
    assert jnp.allclose(y2, y2_bf, atol=1e-3), "split-path y mismatch"
    assert jnp.allclose(ld2, ld2_bf, atol=1e-3), "split-path log_det mismatch"

    print("KERNEL_OK")
</pallas_src>

<mosaic_0001>
module attributes {stable_mosaic.version = 11 : i64} {
  func.func @_coupling_kernel_fused(%arg0: i32, %arg1: memref<8x128xf32, #tpu.memory_space<vmem>>, %arg2: memref<1x128xf32, #tpu.memory_space<vmem>>, %arg3: memref<1x128xf32, #tpu.memory_space<vmem>>, %arg4: memref<128x256xbf16, #tpu.memory_space<vmem>>, %arg5: memref<1x256xf32, #tpu.memory_space<vmem>>, %arg6: memref<256x256xbf16, #tpu.memory_space<vmem>>, %arg7: memref<1x256xf32, #tpu.memory_space<vmem>>, %arg8: memref<256x256xbf16, #tpu.memory_space<vmem>>, %arg9: memref<1x256xf32, #tpu.memory_space<vmem>>, %arg10: memref<8x128xf32, #tpu.memory_space<vmem>>, %arg11: memref<8x1xf32, #tpu.memory_space<vmem>>) attributes {dimension_semantics = [#tpu.dimension_semantics<parallel>], iteration_bounds = array<i64: 1>, scalar_prefetch = 0 : i64, scratch_operands = 0 : i64, tpu.core_type = #tpu.core_type<tc>, window_params = [{transform_indices = @transform_0, window_bounds = array<i64: 8, 128>}, {pipeline_mode = #tpu.pipeline_mode<synchronous>, transform_indices = @transform_1, window_bounds = array<i64: 1, 128>}, {pipeline_mode = #tpu.pipeline_mode<synchronous>, transform_indices = @transform_2, window_bounds = array<i64: 1, 128>}, {pipeline_mode = #tpu.pipeline_mode<synchronous>, transform_indices = @transform_3, window_bounds = array<i64: 128, 256>}, {pipeline_mode = #tpu.pipeline_mode<synchronous>, transform_indices = @transform_4, window_bounds = array<i64: 1, 256>}, {pipeline_mode = #tpu.pipeline_mode<synchronous>, transform_indices = @transform_5, window_bounds = array<i64: 256, 256>}, {pipeline_mode = #tpu.pipeline_mode<synchronous>, transform_indices = @transform_6, window_bounds = array<i64: 1, 256>}, {pipeline_mode = #tpu.pipeline_mode<synchronous>, transform_indices = @transform_7, window_bounds = array<i64: 256, 256>}, {pipeline_mode = #tpu.pipeline_mode<synchronous>, transform_indices = @transform_8, window_bounds = array<i64: 1, 256>}, {transform_indices = @transform_9, window_bounds = array<i64: 8, 128>}, {transform_indices = @transform_10, window_bounds = array<i64: 8, 1>}]} {
    %c0 = arith.constant 0 : index
    %c0_0 = arith.constant 0 : index
    %0 = vector.load %arg1[%c0, %c0_0] : memref<8x128xf32, #tpu.memory_space<vmem>>, vector<8x128xf32>
    %c0_1 = arith.constant 0 : index
    %c0_2 = arith.constant 0 : index
    %1 = vector.load %arg2[%c0_1, %c0_2] : memref<1x128xf32, #tpu.memory_space<vmem>>, vector<1x128xf32>
    %c0_3 = arith.constant 0 : index
    %c0_4 = arith.constant 0 : index
    %2 = vector.load %arg3[%c0_3, %c0_4] : memref<1x128xf32, #tpu.memory_space<vmem>>, vector<1x128xf32>
    %3 = vector.broadcast %1 : vector<1x128xf32> to vector<8x128xf32>
    %4 = arith.mulf %0, %3 : vector<8x128xf32>
    %5 = arith.truncf %4 : vector<8x128xf32> to vector<8x128xbf16>
    %c0_5 = arith.constant 0 : index
    %c0_6 = arith.constant 0 : index
    %6 = vector.load %arg4[%c0_5, %c0_6] : memref<128x256xbf16, #tpu.memory_space<vmem>>, vector<128x256xbf16>
    %cst = arith.constant dense<0.000000e+00> : vector<8x256xf32>
    %7 = tpu.matmul %5, %6, %cst {dimension_numbers = #tpu.dot_dimension_numbers<[1], [0], [0], [1], [0, 0, 1, 1], [], []>} : vector<8x128xbf16>, vector<128x256xbf16>, vector<8x256xf32> -> vector<8x256xf32>
    %c0_7 = arith.constant 0 : index
    %c0_8 = arith.constant 0 : index
    %8 = vector.load %arg5[%c0_7, %c0_8] : memref<1x256xf32, #tpu.memory_space<vmem>>, vector<1x256xf32>
    %9 = vector.broadcast %8 : vector<1x256xf32> to vector<8x256xf32>
    %10 = arith.addf %7, %9 : vector<8x256xf32>
    %cst_9 = arith.constant 0.000000e+00 : f32
    %11 = vector.broadcast %cst_9 : f32 to vector<8x256xf32>
    %12 = arith.maximumf %10, %11 : vector<8x256xf32>
    %13 = arith.truncf %12 : vector<8x256xf32> to vector<8x256xbf16>
    %c0_10 = arith.constant 0 : index
    %c0_11 = arith.constant 0 : index
    %14 = vector.load %arg6[%c0_10, %c0_11] : memref<256x256xbf16, #tpu.memory_space<vmem>>, vector<256x256xbf16>
    %cst_12 = arith.constant dense<0.000000e+00> : vector<8x256xf32>
    %15 = tpu.matmul %13, %14, %cst_12 {dimension_numbers = #tpu.dot_dimension_numbers<[1], [0], [0], [1], [0, 0, 1, 1], [], []>} : vector<8x256xbf16>, vector<256x256xbf16>, vector<8x256xf32> -> vector<8x256xf32>
    %c0_13 = arith.constant 0 : index
    %c0_14 = arith.constant 0 : index
    %16 = vector.load %arg7[%c0_13, %c0_14] : memref<1x256xf32, #tpu.memory_space<vmem>>, vector<1x256xf32>
    %17 = vector.broadcast %16 : vector<1x256xf32> to vector<8x256xf32>
    %18 = arith.addf %15, %17 : vector<8x256xf32>
    %cst_15 = arith.constant 0.000000e+00 : f32
    %19 = vector.broadcast %cst_15 : f32 to vector<8x256xf32>
    %20 = arith.maximumf %18, %19 : vector<8x256xf32>
    %21 = arith.truncf %20 : vector<8x256xf32> to vector<8x256xbf16>
    %c0_16 = arith.constant 0 : index
    %c0_17 = arith.constant 0 : index
    %22 = vector.load %arg8[%c0_16, %c0_17] : memref<256x256xbf16, #tpu.memory_space<vmem>>, vector<256x256xbf16>
    %cst_18 = arith.constant dense<0.000000e+00> : vector<8x256xf32>
    %23 = tpu.matmul %21, %22, %cst_18 {dimension_numbers = #tpu.dot_dimension_numbers<[1], [0], [0], [1], [0, 0, 1, 1], [], []>} : vector<8x256xbf16>, vector<256x256xbf16>, vector<8x256xf32> -> vector<8x256xf32>
    %c0_19 = arith.constant 0 : index
    %c0_20 = arith.constant 0 : index
    %24 = vector.load %arg9[%c0_19, %c0_20] : memref<1x256xf32, #tpu.memory_space<vmem>>, vector<1x256xf32>
    %25 = vector.broadcast %24 : vector<1x256xf32> to vector<8x256xf32>
    %26 = arith.addf %23, %25 : vector<8x256xf32>
    %27 = vector.extract_strided_slice %26 {offsets = [0, 0], sizes = [8, 128], strides = [1, 1]} : vector<8x256xf32> to vector<8x128xf32>
    %28 = math.tanh %27 : vector<8x128xf32>
    %29 = vector.broadcast %2 : vector<1x128xf32> to vector<8x128xf32>
    %30 = arith.mulf %28, %29 : vector<8x128xf32>
    %31 = vector.extract_strided_slice %26 {offsets = [0, 128], sizes = [8, 128], strides = [1, 1]} : vector<8x256xf32> to vector<8x128xf32>
    %32 = vector.broadcast %2 : vector<1x128xf32> to vector<8x128xf32>
    %33 = arith.mulf %31, %32 : vector<8x128xf32>
    %34 = math.exp %30 : vector<8x128xf32>
    %35 = arith.mulf %0, %34 : vector<8x128xf32>
    %36 = arith.addf %35, %33 : vector<8x128xf32>
    %37 = vector.broadcast %2 : vector<1x128xf32> to vector<8x128xf32>
    %38 = arith.mulf %37, %36 : vector<8x128xf32>
    %39 = arith.addf %4, %38 : vector<8x128xf32>
    %c0_21 = arith.constant 0 : index
    %c0_22 = arith.constant 0 : index
    %40 = vector.load %arg10[%c0_21, %c0_22] : memref<8x128xf32, #tpu.memory_space<vmem>>, vector<8x128xf32>
    tpu.vector_store %arg10[%c0_21, %c0_22], %39 {strides = array<i32>} : memref<8x128xf32, #tpu.memory_space<vmem>>, vector<8x128xf32>,
    %cst_23 = arith.constant dense<0.000000e+00> : vector<8xf32>
    %41 = vector.multi_reduction <add>, %30, %cst_23 [1] : vector<8x128xf32> to vector<8xf32>
    %42 = vector.shape_cast %41 : vector<8xf32> to vector<8x1xf32>
    %c0_24 = arith.constant 0 : index
    %c0_25 = arith.constant 0 : index
    %43 = vector.load %arg11[%c0_24, %c0_25] : memref<8x1xf32, #tpu.memory_space<vmem>>, vector<8x1xf32>
    tpu.vector_store %arg11[%c0_24, %c0_25], %42 {strides = array<i32>} : memref<8x1xf32, #tpu.memory_space<vmem>>, vector<8x1xf32>,
    return
  }
  func.func @transform_0(%arg0: i32) -> (i32, i32) {
    %c0_i32 = arith.constant 0 : i32
    %c0_i32_0 = arith.constant 0 : i32
    return %arg0, %c0_i32 : i32, i32
  }
  func.func @transform_1(%arg0: i32) -> (i32, i32) {
    %c0_i32 = arith.constant 0 : i32
    %c0_i32_0 = arith.constant 0 : i32
    %c0_i32_1 = arith.constant 0 : i32
    return %c0_i32, %c0_i32_0 : i32, i32
  }
  func.func @transform_2(%arg0: i32) -> (i32, i32) {
    %c0_i32 = arith.constant 0 : i32
    %c0_i32_0 = arith.constant 0 : i32
    %c0_i32_1 = arith.constant 0 : i32
    return %c0_i32, %c0_i32_0 : i32, i32
  }
  func.func @transform_3(%arg0: i32) -> (i32, i32) {
    %c0_i32 = arith.constant 0 : i32
    %c0_i32_0 = arith.constant 0 : i32
    %c0_i32_1 = arith.constant 0 : i32
    return %c0_i32, %c0_i32_0 : i32, i32
  }
  func.func @transform_4(%arg0: i32) -> (i32, i32) {
    %c0_i32 = arith.constant 0 : i32
    %c0_i32_0 = arith.constant 0 : i32
    %c0_i32_1 = arith.constant 0 : i32
    return %c0_i32, %c0_i32_0 : i32, i32
  }
  func.func @transform_5(%arg0: i32) -> (i32, i32) {
    %c0_i32 = arith.constant 0 : i32
    %c0_i32_0 = arith.constant 0 : i32
    %c0_i32_1 = arith.constant 0 : i32
    return %c0_i32, %c0_i32_0 : i32, i32
  }
  func.func @transform_6(%arg0: i32) -> (i32, i32) {
    %c0_i32 = arith.constant 0 : i32
    %c0_i32_0 = arith.constant 0 : i32
    %c0_i32_1 = arith.constant 0 : i32
    return %c0_i32, %c0_i32_0 : i32, i32
  }
  func.func @transform_7(%arg0: i32) -> (i32, i32) {
    %c0_i32 = arith.constant 0 : i32
    %c0_i32_0 = arith.constant 0 : i32
    %c0_i32_1 = arith.constant 0 : i32
    return %c0_i32, %c0_i32_0 : i32, i32
  }
  func.func @transform_8(%arg0: i32) -> (i32, i32) {
    %c0_i32 = arith.constant 0 : i32
    %c0_i32_0 = arith.constant 0 : i32
    %c0_i32_1 = arith.constant 0 : i32
    return %c0_i32, %c0_i32_0 : i32, i32
  }
  func.func @transform_9(%arg0: i32) -> (i32, i32) {
    %c0_i32 = arith.constant 0 : i32
    %c0_i32_0 = arith.constant 0 : i32
    return %arg0, %c0_i32 : i32, i32
  }
  func.func @transform_10(%arg0: i32) -> (i32, i32) {
    %c0_i32 = arith.constant 0 : i32
    %c0_i32_0 = arith.constant 0 : i32
    return %arg0, %c0_i32 : i32, i32
  }
}

</mosaic_0001>

<llo_original>
// kernel: coupling_layer_forward.1
$region0: #{coupling_layer_forward.1}
  #allocation0 [shape = 'u32[]', space=smem, size = 0x4, offset = 0x4, fixed_abs, tag = 'smem constant byte address 0x4 - core index']
  #allocation1 [shape = 'u32[144,128]{1,0:T(1,128)}', space=vmem, size = 0x12000, scoped, tag = 'internal scratch']
  %s0 = inlined_call_operand.vmem [shape: f32[8,128], index: 0, kind: input, shape index: {}]
  %s1 = inlined_call_operand.vmem [shape: f32[1,128], index: 1, kind: input, shape index: {}]
  %s2 = inlined_call_operand.vmem [shape: f32[1,128], index: 2, kind: input, shape index: {}]
  %s3 = inlined_call_operand.hbm [shape: bf16[128,256], index: 3, kind: input, shape index: {}]
  %s4 = inlined_call_operand.vmem [shape: f32[1,256], index: 4, kind: input, shape index: {}]
  %s5 = inlined_call_operand.hbm [shape: bf16[256,256], index: 5, kind: input, shape index: {}]
  %s6 = inlined_call_operand.vmem [shape: f32[1,256], index: 6, kind: input, shape index: {}]
  %s7 = inlined_call_operand.hbm [shape: bf16[256,256], index: 7, kind: input, shape index: {}]
  %s8 = inlined_call_operand.vmem [shape: f32[1,256], index: 8, kind: input, shape index: {}]
  %s9 = inlined_call_operand.vmem [shape: f32[8,128], index: 9, kind: output, shape index: {0}]
  %s10 = inlined_call_operand.vmem [shape: f32[8,1], index: 10, kind: output, shape index: {1}]
  %11 = xla_tuple %s9, %s10
  %s12 = sld [smem:[#allocation0]]
  $region66: #{coupling_layer_forward.1} parent=0
    _
  %s14 = ssub.s32 1, %s12
  %s15 = scalar_select 0, %s14, %s12
  $region1: #{coupling_layer_forward.1} parent=0
    #allocation2 [shape = 'u8[65536]{0}', space=vmem, size = 0x10000, scoped, tag = 'input window, operand 3, single buffered']
    #allocation3 [shape = 's32[1]{0}', space=sflag, size = 0x4, scoped, tag = 'scoped memory for coupling_layer_forward.1']
    #allocation4 [shape = 'u8[131072]{0}', space=vmem, size = 0x20000, scoped, tag = 'input window, operand 5, single buffered']
    #allocation5 [shape = 's32[1]{0}', space=sflag, size = 0x4, scoped, tag = 'scoped memory for coupling_layer_forward.1']
    #allocation6 [shape = 'u8[131072]{0}', space=vmem, size = 0x20000, scoped, tag = 'input window, operand 7, single buffered']
    %16 = vsyncpa [#allocation3], 0
    %17 = vsyncpa [#allocation5], 0
    // Predicated region
    $region2: #{coupling_layer_forward.1} parent=1 // pred_check
      _
    $region3: #{coupling_layer_forward.1} parent=1 // pred_check_branch
      %19 = sbr.rel (0) target = $region5
    $region4: #{coupling_layer_forward.1} parent=1 // pred_region
      _
    $region5: #{coupling_layer_forward.1} parent=1 // pred_fallthru
      _
    // Predicated region
    $region6: #{coupling_layer_forward.1} parent=1 // pred_check
      _
    $region7: #{coupling_layer_forward.1} parent=1 // pred_check_branch
      %21 = sbr.rel (0) target = $region9
    $region8: #{coupling_layer_forward.1} parent=1 // pred_region
      _
    $region9: #{coupling_layer_forward.1} parent=1 // pred_fallthru
      _
    // Predicated region
    $region10: #{coupling_layer_forward.1} parent=1 // pred_check
      _
    $region11: #{coupling_layer_forward.1} parent=1 // pred_check_branch
      %23 = sbr.rel (0) target = $region13
    $region12: #{coupling_layer_forward.1} parent=1 // pred_region
      _
    $region13: #{coupling_layer_forward.1} parent=1 // pred_fallthru
      _
    // Predicated region
    $region14: #{coupling_layer_forward.1} parent=1 // pred_check
      _
    $region15: #{coupling_layer_forward.1} parent=1 // pred_check_branch
      %25 = sbr.rel (0) target = $region17
    $region16: #{coupling_layer_forward.1} parent=1 // pred_region
      %s27 = ssub.s32 2048, 2048
      %28 = vsyncadd [#allocation3], %s27
      %s29 = sshll.u32 [#allocation2], 4
      %s30 = int_to_ptr.vmem [resolvable:$true] %s29
      %35 = dma.hbm_to_vmem [thread:$0]  %s3, 2048, %s30, [#allocation3], 128, 128, 8
    $region17: #{coupling_layer_forward.1} parent=1 // pred_fallthru
      _
    // Predicated region
    $region18: #{coupling_layer_forward.1} parent=1 // pred_check
      _
    $region19: #{coupling_layer_forward.1} parent=1 // pred_check_branch
      %37 = sbr.rel (0) target = $region21
    $region20: #{coupling_layer_forward.1} parent=1 // pred_region
      _
    $region21: #{coupling_layer_forward.1} parent=1 // pred_fallthru
      _
    // Predicated region
    $region22: #{coupling_layer_forward.1} parent=1 // pred_check
      _
    $region23: #{coupling_layer_forward.1} parent=1 // pred_check_branch
      %39 = sbr.rel (0) target = $region25
    $region24: #{coupling_layer_forward.1} parent=1 // pred_region
      %s41 = ssub.s32 4096, 4096
      %42 = vsyncadd [#allocation5], %s41
      %s43 = sshll.u32 [#allocation4], 4
      %s44 = int_to_ptr.vmem [resolvable:$true] %s43
      %49 = dma.hbm_to_vmem [thread:$0]  %s5, 4096, %s44, [#allocation5], 128, 128, 8
    $region25: #{coupling_layer_forward.1} parent=1 // pred_fallthru
      _
    // Predicated region
    $region26: #{coupling_layer_forward.1} parent=1 // pred_check
      _
    $region27: #{coupling_layer_forward.1} parent=1 // pred_check_branch
      %51 = sbr.rel (0) target = $region29
    $region28: #{coupling_layer_forward.1} parent=1 // pred_region
      _
    $region29: #{coupling_layer_forward.1} parent=1 // pred_fallthru
      _
    // Predicated region
    $region30: #{coupling_layer_forward.1} parent=1 // pred_check
      _
    $region31: #{coupling_layer_forward.1} parent=1 // pred_check_branch
      %53 = sbr.rel (0) target = $region33
    $region32: #{coupling_layer_forward.1} parent=1 // pred_region
      %s55 = ssub.s32 4096, 4096
      %56 = vsyncadd [#allocation5], %s55
      %s57 = sshll.u32 [#allocation6], 4
      %s58 = int_to_ptr.vmem [resolvable:$true] %s57
      %63 = dma.hbm_to_vmem [thread:$0]  %s7, 4096, %s58, [#allocation5], 128, 128, 8
    $region33: #{coupling_layer_forward.1} parent=1 // pred_fallthru
      _
    // Predicated region
    $region34: #{coupling_layer_forward.1} parent=1 // pred_check
      _
    $region35: #{coupling_layer_forward.1} parent=1 // pred_check_branch
      %65 = sbr.rel (0) target = $region37
    $region36: #{coupling_layer_forward.1} parent=1 // pred_region
      _
    $region37: #{coupling_layer_forward.1} parent=1 // pred_fallthru
      _
    // Predicated region
    $region38: #{coupling_layer_forward.1} parent=1 // pred_check
      _
    $region39: #{coupling_layer_forward.1} parent=1 // pred_check_branch
      %67 = sbr.rel (0) target = $region41
    $region40: #{coupling_layer_forward.1} parent=1 // pred_region
      %68 = dma.done [#allocation3], 2048
    $region41: #{coupling_layer_forward.1} parent=1 // pred_fallthru
      _
    // Predicated region
    $region42: #{coupling_layer_forward.1} parent=1 // pred_check
      _
    $region43: #{coupling_layer_forward.1} parent=1 // pred_check_branch
      %70 = sbr.rel (0) target = $region45
    $region44: #{coupling_layer_forward.1} parent=1 // pred_region
      %71 = dma.done [#allocation5], 4096
    $region45: #{coupling_layer_forward.1} parent=1 // pred_fallthru
      _
    // Predicated region
    $region46: #{coupling_layer_forward.1} parent=1 // pred_check
      _
    $region47: #{coupling_layer_forward.1} parent=1 // pred_check_branch
      %73 = sbr.rel (0) target = $region49
    $region48: #{coupling_layer_forward.1} parent=1 // pred_region
      %74 = dma.done [#allocation5], 4096
    $region49: #{coupling_layer_forward.1} parent=1 // pred_fallthru
      _
    %v76 = vld [vmem:[%s0] sm:$0xff]
    %v77 = vld [vmem:[%s1] sm:$0x1]
    %v78 = vld [vmem:[%s2] sm:$0x1]
    %v80 = vlaneseq
    %v81 = vshrl.u32 %v80, 7
    %v82 = vsub.s32 0, %v81
    %v83 = vrot.slane %v77, %v82
    %v85 = vmul.f32 %v76, %v83
    %v86 = vpack.c.bf16 %v85, %v85
    %v87 = vld [vmem:[#allocation2] sm:$0xff]
    %v88 = vld [vmem:[#allocation2 + $0x8] sm:$0xff]
    %v89 = vld [vmem:[#allocation2 + $0x10] sm:$0xff]
    %v90 = vld [vmem:[#allocation2 + $0x18] sm:$0xff]
    %v91 = vld [vmem:[#allocation2 + $0x20] sm:$0xff]
    %v92 = vld [vmem:[#allocation2 + $0x28] sm:$0xff]
    %v93 = vld [vmem:[#allocation2 + $0x30] sm:$0xff]
    %v94 = vld [vmem:[#allocation2 + $0x38] sm:$0xff]
    %v95 = vld [vmem:[#allocation2 + $0x40] sm:$0xff]
    %v96 = vld [vmem:[#allocation2 + $0x48] sm:$0xff]
    %v97 = vld [vmem:[#allocation2 + $0x50] sm:$0xff]
    %v98 = vld [vmem:[#allocation2 + $0x58] sm:$0xff]
    %v99 = vld [vmem:[#allocation2 + $0x60] sm:$0xff]
    %v100 = vld [vmem:[#allocation2 + $0x68] sm:$0xff]
    %v101 = vld [vmem:[#allocation2 + $0x70] sm:$0xff]
    %v102 = vld [vmem:[#allocation2 + $0x78] sm:$0xff]
    %v103 = vld [vmem:[%s4] sm:$0x3]
    %v105 = vlaneseq
    %v106 = vshrl.u32 %v105, 7
    %v107 = vsub.s32 0, %v106
    %v108 = vrot.slane %v103, %v107
    %v109 = vlaneseq
    %v110 = vshrl.u32 %v109, 7
    %v111 = vsub.s32 1, %v110
    %v112 = vrot.slane %v103, %v111
    %v131 = vunpack.c.l.b16 %v87
    %v132 = vunpack.c.h.b16 %v87
    %v133 = vunpack.c.l.b16 %v88
    %v134 = vunpack.c.h.b16 %v88
    %v135 = vunpack.c.l.b16 %v89
    %v136 = vunpack.c.h.b16 %v89
    %v137 = vunpack.c.l.b16 %v90
    %v138 = vunpack.c.h.b16 %v90
    %v139 = vunpack.c.l.b16 %v91
    %v140 = vunpack.c.h.b16 %v91
    %v141 = vunpack.c.l.b16 %v92
    %v142 = vunpack.c.h.b16 %v92
    %v143 = vunpack.c.l.b16 %v93
    %v144 = vunpack.c.h.b16 %v93
    %v145 = vunpack.c.l.b16 %v94
    %v146 = vunpack.c.h.b16 %v94
    %v147 = vunpack.c.l.b16 %v95
    %v148 = vunpack.c.h.b16 %v95
    %v149 = vunpack.c.l.b16 %v96
    %v150 = vunpack.c.h.b16 %v96
    %v151 = vunpack.c.l.b16 %v97
    %v152 = vunpack.c.h.b16 %v97
    %v153 = vunpack.c.l.b16 %v98
    %v154 = vunpack.c.h.b16 %v98
    %v155 = vunpack.c.l.b16 %v99
    %v156 = vunpack.c.h.b16 %v99
    %v157 = vunpack.c.l.b16 %v100
    %v158 = vunpack.c.h.b16 %v100
    %v159 = vunpack.c.l.b16 %v101
    %v160 = vunpack.c.h.b16 %v101
    %v161 = vunpack.c.l.b16 %v102
    %v162 = vunpack.c.h.b16 %v102
    %v163 = vpack.c.b16 %v133, %v131
    %v164 = vpack.c.b16 %v134, %v132
    %v165 = vpack.c.b16 %v137, %v135
    %v166 = vpack.c.b16 %v138, %v136
    %v167 = vpack.c.b16 %v141, %v139
    %v168 = vpack.c.b16 %v142, %v140
    %v169 = vpack.c.b16 %v145, %v143
    %v170 = vpack.c.b16 %v146, %v144
    %v171 = vpack.c.b16 %v149, %v147
    %v172 = vpack.c.b16 %v150, %v148
    %v173 = vpack.c.b16 %v153, %v151
    %v174 = vpack.c.b16 %v154, %v152
    %v175 = vpack.c.b16 %v157, %v155
    %v176 = vpack.c.b16 %v158, %v156
    %v177 = vpack.c.b16 %v161, %v159
    %v178 = vpack.c.b16 %v162, %v160
    %195 = vmatprep.subr.bf16.mxu0 %v164
    %196 = vmatpush1.bf16.msra.mxu0 %v163
    %197 = vmatprep.subr.bf16.mxu0 %v166
    %198 = vmatpush1.bf16.msra.mxu0 %v165
    %199 = vmatprep.subr.bf16.mxu0 %v168
    %200 = vmatpush1.bf16.msra.mxu0 %v167
    %201 = vmatprep.subr.bf16.mxu0 %v170
    %202 = vmatpush1.bf16.msra.mxu0 %v169
    %203 = vmatprep.subr.bf16.mxu0 %v172
    %204 = vmatpush1.bf16.msra.mxu0 %v171
    %205 = vmatprep.subr.bf16.mxu0 %v174
    %206 = vmatpush1.bf16.msra.mxu0 %v173
    %207 = vmatprep.subr.bf16.mxu0 %v176
    %208 = vmatpush1.bf16.msra.mxu0 %v175
    %209 = vmatprep.subr.bf16.mxu0 %v178
    %210 = vmatpush1.bf16.msra.mxu0 %v177
    %211 = vmatprep.subr.bf16.mxu0 0
    %212 = vmatpush1.bf16.msra.mxu0 0
    %213 = vmatprep.subr.bf16.mxu0 0
    %214 = vmatpush1.bf16.msra.mxu0 0
    %215 = vmatprep.subr.bf16.mxu0 0
    %216 = vmatpush1.bf16.msra.mxu0 0
    %217 = vmatprep.subr.bf16.mxu0 0
    %218 = vmatpush1.bf16.msra.mxu0 0
    %219 = vmatprep.subr.bf16.mxu0 0
    %220 = vmatpush1.bf16.msra.mxu0 0
    %221 = vmatprep.subr.bf16.mxu0 0
    %222 = vmatpush1.bf16.msra.mxu0 0
    %223 = vmatprep.subr.bf16.mxu0 0
    %224 = vmatpush1.bf16.msra.mxu0 0
    %225 = vmatprep.subr.bf16.mxu0 0
    %226 = vmatpush1.bf16.msra.mxu0 0
    %227 = vmatprep.mubr.bf16.mxu0 0
    %228 = vmatmul.mubr.bf16.gmra.mrb[0].mxu0 %v86
    %v229 = vpop.f32.mrb[0].mxu0
    %v230 = vadd.f32 %v108, %v229
    %v231 = vpop.f32.mrb[0].mxu0
    %v232 = vadd.f32 %v112, %v231
    %v233 = vpop.f32.mrb[0].mxu0
    %v234 = vpop.f32.mrb[0].mxu0
    %235 = vdwg.mxu0
    %v236 = vmax.f32 %v230, 0.0
    %v237 = vmax.f32 %v232, 0.0
    %v238 = vpack.c.bf16 %v236, %v236
    %v239 = vpack.c.bf16 %v237, %v237
    %v240 = vld [vmem:[#allocation4] sm:$0xff]
    %v241 = vld [vmem:[#allocation4 + $0x8] sm:$0xff]
    %v242 = vld [vmem:[#allocation4 + $0x10] sm:$0xff]
    %v243 = vld [vmem:[#allocation4 + $0x18] sm:$0xff]
    %v244 = vld [vmem:[#allocation4 + $0x20] sm:$0xff]
    %v245 = vld [vmem:[#allocation4 + $0x28] sm:$0xff]
    %v246 = vld [vmem:[#allocation4 + $0x30] sm:$0xff]
    %v247 = vld [vmem:[#allocation4 + $0x38] sm:$0xff]
    %v248 = vld [vmem:[#allocation4 + $0x40] sm:$0xff]
    %v249 = vld [vmem:[#allocation4 + $0x48] sm:$0xff]
    %v250 = vld [vmem:[#allocation4 + $0x50] sm:$0xff]
    %v251 = vld [vmem:[#allocation4 + $0x58] sm:$0xff]
    %v252 = vld [vmem:[#allocation4 + $0x60] sm:$0xff]
    %v253 = vld [vmem:[#allocation4 + $0x68] sm:$0xff]
    %v254 = vld [vmem:[#allocation4 + $0x70] sm:$0xff]
    %v255 = vld [vmem:[#allocation4 + $0x78] sm:$0xff]
    %v256 = vld [vmem:[#allocation4 + $0x80] sm:$0xff]
    %v257 = vld [vmem:[#allocation4 + $0x88] sm:$0xff]
    %v258 = vld [vmem:[#allocation4 + $0x90] sm:$0xff]
    %v259 = vld [vmem:[#allocation4 + $0x98] sm:$0xff]
    %v260 = vld [vmem:[#allocation4 + $0xa0] sm:$0xff]
    %v261 = vld [vmem:[#allocation4 + $0xa8] sm:$0xff]
    %v262 = vld [vmem:[#allocation4 + $0xb0] sm:$0xff]
    %v263 = vld [vmem:[#allocation4 + $0xb8] sm:$0xff]
    %v264 = vld [vmem:[#allocation4 + $0xc0] sm:$0xff]
    %v265 = vld [vmem:[#allocation4 + $0xc8] sm:$0xff]
    %v266 = vld [vmem:[#allocation4 + $0xd0] sm:$0xff]
    %v267 = vld [vmem:[#allocation4 + $0xd8] sm:$0xff]
    %v268 = vld [vmem:[#allocation4 + $0xe0] sm:$0xff]
    %v269 = vld [vmem:[#allocation4 + $0xe8] sm:$0xff]
    %v270 = vld [vmem:[#allocation4 + $0xf0] sm:$0xff]
    %v271 = vld [vmem:[#allocation4 + $0xf8] sm:$0xff]
    %v272 = vld [vmem:[%s6] sm:$0x3]
    %v274 = vlaneseq
    %v275 = vshrl.u32 %v274, 7
    %v276 = vsub.s32 0, %v275
    %v277 = vrot.slane %v272, %v276
    %v278 = vlaneseq
    %v279 = vshrl.u32 %v278, 7
    %v280 = vsub.s32 1, %v279
    %v281 = vrot.slane %v272, %v280
    %v316 = vunpack.c.l.b16 %v240
    %v317 = vunpack.c.h.b16 %v240
    %v318 = vunpack.c.l.b16 %v241
    %v319 = vunpack.c.h.b16 %v241
    %v320 = vunpack.c.l.b16 %v242
    %v321 = vunpack.c.h.b16 %v242
    %v322 = vunpack.c.l.b16 %v243
    %v323 = vunpack.c.h.b16 %v243
    %v324 = vunpack.c.l.b16 %v244
    %v325 = vunpack.c.h.b16 %v244
    %v326 = vunpack.c.l.b16 %v245
    %v327 = vunpack.c.h.b16 %v245
    %v328 = vunpack.c.l.b16 %v246
    %v329 = vunpack.c.h.b16 %v246
    %v330 = vunpack.c.l.b16 %v247
    %v331 = vunpack.c.h.b16 %v247
    %v332 = vunpack.c.l.b16 %v248
    %v333 = vunpack.c.h.b16 %v248
    %v334 = vunpack.c.l.b16 %v249
    %v335 = vunpack.c.h.b16 %v249
    %v336 = vunpack.c.l.b16 %v250
    %v337 = vunpack.c.h.b16 %v250
    %v338 = vunpack.c.l.b16 %v251
    %v339 = vunpack.c.h.b16 %v251
    %v340 = vunpack.c.l.b16 %v252
    %v341 = vunpack.c.h.b16 %v252
    %v342 = vunpack.c.l.b16 %v253
    %v343 = vunpack.c.h.b16 %v253
    %v344 = vunpack.c.l.b16 %v254
    %v345 = vunpack.c.h.b16 %v254
    %v346 = vunpack.c.l.b16 %v255
    %v347 = vunpack.c.h.b16 %v255
    %v348 = vunpack.c.l.b16 %v256
    %v349 = vunpack.c.h.b16 %v256
    %v350 = vunpack.c.l.b16 %v257
    %v351 = vunpack.c.h.b16 %v257
    %v352 = vunpack.c.l.b16 %v258
    %v353 = vunpack.c.h.b16 %v258
    %v354 = vunpack.c.l.b16 %v259
    %v355 = vunpack.c.h.b16 %v259
    %v356 = vunpack.c.l.b16 %v260
    %v357 = vunpack.c.h.b16 %v260
    %v358 = vunpack.c.l.b16 %v261
    %v359 = vunpack.c.h.b16 %v261
    %v360 = vunpack.c.l.b16 %v262
    %v361 = vunpack.c.h.b16 %v262
    %v362 = vunpack.c.l.b16 %v263
    %v363 = vunpack.c.h.b16 %v263
    %v364 = vunpack.c.l.b16 %v264
    %v365 = vunpack.c.h.b16 %v264
    %v366 = vunpack.c.l.b16 %v265
    %v367 = vunpack.c.h.b16 %v265
    %v368 = vunpack.c.l.b16 %v266
    %v369 = vunpack.c.h.b16 %v266
    %v370 = vunpack.c.l.b16 %v267
    %v371 = vunpack.c.h.b16 %v267
    %v372 = vunpack.c.l.b16 %v268
    %v373 = vunpack.c.h.b16 %v268
    %v374 = vunpack.c.l.b16 %v269
    %v375 = vunpack.c.h.b16 %v269
    %v376 = vunpack.c.l.b16 %v270
    %v377 = vunpack.c.h.b16 %v270
    %v378 = vunpack.c.l.b16 %v271
    %v379 = vunpack.c.h.b16 %v271
    %v380 = vpack.c.b16 %v318, %v316
    %v381 = vpack.c.b16 %v319, %v317
    %v382 = vpack.c.b16 %v322, %v320
    %v383 = vpack.c.b16 %v323, %v321
    %v384 = vpack.c.b16 %v326, %v324
    %v385 = vpack.c.b16 %v327, %v325
    %v386 = vpack.c.b16 %v330, %v328
    %v387 = vpack.c.b16 %v331, %v329
    %v388 = vpack.c.b16 %v334, %v332
    %v389 = vpack.c.b16 %v335, %v333
    %v390 = vpack.c.b16 %v338, %v336
    %v391 = vpack.c.b16 %v339, %v337
    %v392 = vpack.c.b16 %v342, %v340
    %v393 = vpack.c.b16 %v343, %v341
    %v394 = vpack.c.b16 %v346, %v344
    %v395 = vpack.c.b16 %v347, %v345
    %v396 = vpack.c.b16 %v350, %v348
    %v397 = vpack.c.b16 %v351, %v349
    %v398 = vpack.c.b16 %v354, %v352
    %v399 = vpack.c.b16 %v355, %v353
    %v400 = vpack.c.b16 %v358, %v356
    %v401 = vpack.c.b16 %v359, %v357
    %v402 = vpack.c.b16 %v362, %v360
    %v403 = vpack.c.b16 %v363, %v361
    %v404 = vpack.c.b16 %v366, %v364
    %v405 = vpack.c.b16 %v367, %v365
    %v406 = vpack.c.b16 %v370, %v368
    %v407 = vpack.c.b16 %v371, %v369
    %v408 = vpack.c.b16 %v374, %v372
    %v409 = vpack.c.b16 %v375, %v373
    %v410 = vpack.c.b16 %v378, %v376
    %v411 = vpack.c.b16 %v379, %v377
    %444 = vmatprep.subr.bf16.mxu0 %v381
    %445 = vmatpush1.bf16.msra.mxu0 %v380
    %446 = vmatprep.subr.bf16.mxu0 %v383
    %447 = vmatpush1.bf16.msra.mxu0 %v382
    %448 = vmatprep.subr.bf16.mxu0 %v385
    %449 = vmatpush1.bf16.msra.mxu0 %v384
    %450 = vmatprep.subr.bf16.mxu0 %v387
    %451 = vmatpush1.bf16.msra.mxu0 %v386
    %452 = vmatprep.subr.bf16.mxu0 %v389
    %453 = vmatpush1.bf16.msra.mxu0 %v388
    %454 = vmatprep.subr.bf16.mxu0 %v391
    %455 = vmatpush1.bf16.msra.mxu0 %v390
    %456 = vmatprep.subr.bf16.mxu0 %v393
    %457 = vmatpush1.bf16.msra.mxu0 %v392
    %458 = vmatprep.subr.bf16.mxu0 %v395
    %459 = vmatpush1.bf16.msra.mxu0 %v394
    %460 = vmatprep.subr.bf16.mxu0 %v397
    %461 = vmatpush1.bf16.msra.mxu0 %v396
    %462 = vmatprep.subr.bf16.mxu0 %v399
    %463 = vmatpush1.bf16.msra.mxu0 %v398
    %464 = vmatprep.subr.bf16.mxu0 %v401
    %465 = vmatpush1.bf16.msra.mxu0 %v400
    %466 = vmatprep.subr.bf16.mxu0 %v403
    %467 = vmatpush1.bf16.msra.mxu0 %v402
    %468 = vmatprep.subr.bf16.mxu0 %v405
    %469 = vmatpush1.bf16.msra.mxu0 %v404
    %470 = vmatprep.subr.bf16.mxu0 %v407
    %471 = vmatpush1.bf16.msra.mxu0 %v406
    %472 = vmatprep.subr.bf16.mxu0 %v409
    %473 = vmatpush1.bf16.msra.mxu0 %v408
    %474 = vmatprep.subr.bf16.mxu0 %v411
    %475 = vmatpush1.bf16.msra.mxu0 %v410
    %476 = vmatprep.mubr.bf16.mxu0 %v239
    %477 = vmatmul.mubr.bf16.gmra.mrb[0].mxu0 %v238
    %v478 = vpop.f32.mrb[0].mxu0
    %v479 = vadd.f32 %v277, %v478
    %v480 = vpop.f32.mrb[0].mxu0
    %v481 = vadd.f32 %v281, %v480
    %v482 = vpop.f32.mrb[0].mxu0
    %v483 = vpop.f32.mrb[0].mxu0
    %484 = vdwg.mxu0
    %v485 = vmax.f32 %v479, 0.0
    %v486 = vmax.f32 %v481, 0.0
    %v487 = vpack.c.bf16 %v485, %v485
    %v488 = vpack.c.bf16 %v486, %v486
    %v489 = vld [vmem:[#allocation6] sm:$0xff]
    %v490 = vld [vmem:[#allocation6 + $0x8] sm:$0xff]
    %v491 = vld [vmem:[#allocation6 + $0x10] sm:$0xff]
    %v492 = vld [vmem:[#allocation6 + $0x18] sm:$0xff]
    %v493 = vld [vmem:[#allocation6 + $0x20] sm:$0xff]
    %v494 = vld [vmem:[#allocation6 + $0x28] sm:$0xff]
    %v495 = vld [vmem:[#allocation6 + $0x30] sm:$0xff]
    %v496 = vld [vmem:[#allocation6 + $0x38] sm:$0xff]
    %v497 = vld [vmem:[#allocation6 + $0x40] sm:$0xff]
    %v498 = vld [vmem:[#allocation6 + $0x48] sm:$0xff]
    %v499 = vld [vmem:[#allocation6 + $0x50] sm:$0xff]
    %v500 = vld [vmem:[#allocation6 + $0x58] sm:$0xff]
    %v501 = vld [vmem:[#allocation6 + $0x60] sm:$0xff]
    %v502 = vld [vmem:[#allocation6 + $0x68] sm:$0xff]
    %v503 = vld [vmem:[#allocation6 + $0x70] sm:$0xff]
    %v504 = vld [vmem:[#allocation6 + $0x78] sm:$0xff]
    %v505 = vld [vmem:[#allocation6 + $0x80] sm:$0xff]
    %v506 = vld [vmem:[#allocation6 + $0x88] sm:$0xff]
    %v507 = vld [vmem:[#allocation6 + $0x90] sm:$0xff]
    %v508 = vld [vmem:[#allocation6 + $0x98] sm:$0xff]
    %v509 = vld [vmem:[#allocation6 + $0xa0] sm:$0xff]
    %v510 = vld [vmem:[#allocation6 + $0xa8] sm:$0xff]
    %v511 = vld [vmem:[#allocation6 + $0xb0] sm:$0xff]
    %v512 = vld [vmem:[#allocation6 + $0xb8] sm:$0xff]
    %v513 = vld [vmem:[#allocation6 + $0xc0] sm:$0xff]
    %v514 = vld [vmem:[#allocation6 + $0xc8] sm:$0xff]
    %v515 = vld [vmem:[#allocation6 + $0xd0] sm:$0xff]
    %v516 = vld [vmem:[#allocation6 + $0xd8] sm:$0xff]
    %v517 = vld [vmem:[#allocation6 + $0xe0] sm:$0xff]
    %v518 = vld [vmem:[#allocation6 + $0xe8] sm:$0xff]
    %v519 = vld [vmem:[#allocation6 + $0xf0] sm:$0xff]
    %v520 = vld [vmem:[#allocation6 + $0xf8] sm:$0xff]
    %v521 = vld [vmem:[%s8] sm:$0x3]
    %v523 = vlaneseq
    %v524 = vshrl.u32 %v523, 7
    %v525 = vsub.s32 0, %v524
    %v526 = vrot.slane %v521, %v525
    %v527 = vlaneseq
    %v528 = vshrl.u32 %v527, 7
    %v529 = vsub.s32 1, %v528
    %v530 = vrot.slane %v521, %v529
    %v565 = vunpack.c.l.b16 %v489
    %v566 = vunpack.c.h.b16 %v489
    %v567 = vunpack.c.l.b16 %v490
    %v568 = vunpack.c.h.b16 %v490
    %v569 = vunpack.c.l.b16 %v491
    %v570 = vunpack.c.h.b16 %v491
    %v571 = vunpack.c.l.b16 %v492
    %v572 = vunpack.c.h.b16 %v492
    %v573 = vunpack.c.l.b16 %v493
    %v574 = vunpack.c.h.b16 %v493
    %v575 = vunpack.c.l.b16 %v494
    %v576 = vunpack.c.h.b16 %v494
    %v577 = vunpack.c.l.b16 %v495
    %v578 = vunpack.c.h.b16 %v495
    %v579 = vunpack.c.l.b16 %v496
    %v580 = vunpack.c.h.b16 %v496
    %v581 = vunpack.c.l.b16 %v497
    %v582 = vunpack.c.h.b16 %v497
    %v583 = vunpack.c.l.b16 %v498
    %v584 = vunpack.c.h.b16 %v498
    %v585 = vunpack.c.l.b16 %v499
    %v586 = vunpack.c.h.b16 %v499
    %v587 = vunpack.c.l.b16 %v500
    %v588 = vunpack.c.h.b16 %v500
    %v589 = vunpack.c.l.b16 %v501
    %v590 = vunpack.c.h.b16 %v501
    %v591 = vunpack.c.l.b16 %v502
    %v592 = vunpack.c.h.b16 %v502
    %v593 = vunpack.c.l.b16 %v503
    %v594 = vunpack.c.h.b16 %v503
    %v595 = vunpack.c.l.b16 %v504
    %v596 = vunpack.c.h.b16 %v504
    %v597 = vunpack.c.l.b16 %v505
    %v598 = vunpack.c.h.b16 %v505
    %v599 = vunpack.c.l.b16 %v506
    %v600 = vunpack.c.h.b16 %v506
    %v601 = vunpack.c.l.b16 %v507
    %v602 = vunpack.c.h.b16 %v507
    %v603 = vunpack.c.l.b16 %v508
    %v604 = vunpack.c.h.b16 %v508
    %v605 = vunpack.c.l.b16 %v509
    %v606 = vunpack.c.h.b16 %v509
    %v607 = vunpack.c.l.b16 %v510
    %v608 = vunpack.c.h.b16 %v510
    %v609 = vunpack.c.l.b16 %v511
    %v610 = vunpack.c.h.b16 %v511
    %v611 = vunpack.c.l.b16 %v512
    %v612 = vunpack.c.h.b16 %v512
    %v613 = vunpack.c.l.b16 %v513
    %v614 = vunpack.c.h.b16 %v513
    %v615 = vunpack.c.l.b16 %v514
    %v616 = vunpack.c.h.b16 %v514
    %v617 = vunpack.c.l.b16 %v515
    %v618 = vunpack.c.h.b16 %v515
    %v619 = vunpack.c.l.b16 %v516
    %v620 = vunpack.c.h.b16 %v516
    %v621 = vunpack.c.l.b16 %v517
    %v622 = vunpack.c.h.b16 %v517
    %v623 = vunpack.c.l.b16 %v518
    %v624 = vunpack.c.h.b16 %v518
    %v625 = vunpack.c.l.b16 %v519
    %v626 = vunpack.c.h.b16 %v519
    %v627 = vunpack.c.l.b16 %v520
    %v628 = vunpack.c.h.b16 %v520
    %v629 = vpack.c.b16 %v567, %v565
    %v630 = vpack.c.b16 %v568, %v566
    %v631 = vpack.c.b16 %v571, %v569
    %v632 = vpack.c.b16 %v572, %v570
    %v633 = vpack.c.b16 %v575, %v573
    %v634 = vpack.c.b16 %v576, %v574
    %v635 = vpack.c.b16 %v579, %v577
    %v636 = vpack.c.b16 %v580, %v578
    %v637 = vpack.c.b16 %v583, %v581
    %v638 = vpack.c.b16 %v584, %v582
    %v639 = vpack.c.b16 %v587, %v585
    %v640 = vpack.c.b16 %v588, %v586
    %v641 = vpack.c.b16 %v591, %v589
    %v642 = vpack.c.b16 %v592, %v590
    %v643 = vpack.c.b16 %v595, %v593
    %v644 = vpack.c.b16 %v596, %v594
    %v645 = vpack.c.b16 %v599, %v597
    %v646 = vpack.c.b16 %v600, %v598
    %v647 = vpack.c.b16 %v603, %v601
    %v648 = vpack.c.b16 %v604, %v602
    %v649 = vpack.c.b16 %v607, %v605
    %v650 = vpack.c.b16 %v608, %v606
    %v651 = vpack.c.b16 %v611, %v609
    %v652 = vpack.c.b16 %v612, %v610
    %v653 = vpack.c.b16 %v615, %v613
    %v654 = vpack.c.b16 %v616, %v614
    %v655 = vpack.c.b16 %v619, %v617
    %v656 = vpack.c.b16 %v620, %v618
    %v657 = vpack.c.b16 %v623, %v621
    %v658 = vpack.c.b16 %v624, %v622
    %v659 = vpack.c.b16 %v627, %v625
    %v660 = vpack.c.b16 %v628, %v626
    %693 = vmatprep.subr.bf16.mxu0 %v630
    %694 = vmatpush1.bf16.msra.mxu0 %v629
    %695 = vmatprep.subr.bf16.mxu0 %v632
    %696 = vmatpush1.bf16.msra.mxu0 %v631
    %697 = vmatprep.subr.bf16.mxu0 %v634
    %698 = vmatpush1.bf16.msra.mxu0 %v633
    %699 = vmatprep.subr.bf16.mxu0 %v636
    %700 = vmatpush1.bf16.msra.mxu0 %v635
    %701 = vmatprep.subr.bf16.mxu0 %v638
    %702 = vmatpush1.bf16.msra.mxu0 %v637
    %703 = vmatprep.subr.bf16.mxu0 %v640
    %704 = vmatpush1.bf16.msra.mxu0 %v639
    %705 = vmatprep.subr.bf16.mxu0 %v642
    %706 = vmatpush1.bf16.msra.mxu0 %v641
    %707 = vmatprep.subr.bf16.mxu0 %v644
    %708 = vmatpush1.bf16.msra.mxu0 %v643
    %709 = vmatprep.subr.bf16.mxu0 %v646
    %710 = vmatpush1.bf16.msra.mxu0 %v645
    %711 = vmatprep.subr.bf16.mxu0 %v648
    %712 = vmatpush1.bf16.msra.mxu0 %v647
    %713 = vmatprep.subr.bf16.mxu0 %v650
    %714 = vmatpush1.bf16.msra.mxu0 %v649
    %715 = vmatprep.subr.bf16.mxu0 %v652
    %716 = vmatpush1.bf16.msra.mxu0 %v651
    %717 = vmatprep.subr.bf16.mxu0 %v654
    %718 = vmatpush1.bf16.msra.mxu0 %v653
    %719 = vmatprep.subr.bf16.mxu0 %v656
    %720 = vmatpush1.bf16.msra.mxu0 %v655
    %721 = vmatprep.subr.bf16.mxu0 %v658
    %722 = vmatpush1.bf16.msra.mxu0 %v657
    %723 = vmatprep.subr.bf16.mxu0 %v660
    %724 = vmatpush1.bf16.msra.mxu0 %v659
    %725 = vmatprep.mubr.bf16.mxu0 %v488
    %726 = vmatmul.mubr.bf16.gmra.mrb[0].mxu0 %v487
    %v727 = vpop.f32.mrb[0].mxu0
    %v728 = vadd.f32 %v526, %v727
    %v729 = vpop.f32.mrb[0].mxu0
    %v730 = vadd.f32 %v530, %v729
    %v731 = vpop.f32.mrb[0].mxu0
    %v732 = vpop.f32.mrb[0].mxu0
    %733 = vdwg.mxu0
    %v734 = vtanh.pop %v728
    %v736 = vlaneseq
    %v737 = vshrl.u32 %v736, 7
    %v738 = vsub.s32 0, %v737
    %v739 = vrot.slane %v78, %v738
    %v741 = vmul.f32 %v734, %v739
    %v742 = vmul.f32 %v730, %v739
    %v743 = vmul.f32 %v741, 1.442695
    %v744 = vpow.pop %v743
    %v745 = vmul.f32 %v76, %v744
    %v746 = vadd.f32 %v745, %v742
    %v747 = vmul.f32 %v739, %v746
    %v748 = vadd.f32 %v85, %v747
    %749 = vst [vmem:[%s9] sm:$0xff] %v748
    %750 = vadd.xlane.f32.xlu0 %v741
    %v751 = vpop.xlane.xlu0 %750
    %vm752 = vcmask 7168
    %753 = vst.msk [vmem:[%s10] sm:$0xff] %vm752, %v751
    // Predicated region
    $region50: #{coupling_layer_forward.1} parent=1 // pred_check
      _
    $region51: #{coupling_layer_forward.1} parent=1 // pred_check_branch
      %755 = sbr.rel (0) target = $region53
    $region52: #{coupling_layer_forward.1} parent=1 // pred_region
      _
    $region53: #{coupling_layer_forward.1} parent=1 // pred_fallthru
      _
    // Predicated region
    $region54: #{coupling_layer_forward.1} parent=1 // pred_check
      _
    $region55: #{coupling_layer_forward.1} parent=1 // pred_check_branch
      %757 = sbr.rel (0) target = $region57
    $region56: #{coupling_layer_forward.1} parent=1 // pred_region
      _
    $region57: #{coupling_layer_forward.1} parent=1 // pred_fallthru
      _
    // Predicated region
    $region58: #{coupling_layer_forward.1} parent=1 // pred_check
      _
    $region59: #{coupling_layer_forward.1} parent=1 // pred_check_branch
      %759 = sbr.rel (0) target = $region61
    $region60: #{coupling_layer_forward.1} parent=1 // pred_region
      _
    $region61: #{coupling_layer_forward.1} parent=1 // pred_fallthru
      _
    // Predicated region
    $region62: #{coupling_layer_forward.1} parent=1 // pred_check
      _
    $region63: #{coupling_layer_forward.1} parent=1 // pred_check_branch
      %761 = sbr.rel (0) target = $region65
    $region64: #{coupling_layer_forward.1} parent=1 // pred_region
      _
    $region65: #{coupling_layer_forward.1} parent=1 // pred_fallthru
      _
    %762 = vsyncpa [#allocation3], 1
    %763 = vsyncpa [#allocation5], 1

</llo_original>
